<compile_context>
chip_gen: v7x
topology: tpu7x:2x2x1
jax: 0.10.0
libtpu: 0.0.40
codegen_flags: <defaults>
</compile_context>

<pallas_src>
import math

import jax
import jax.numpy as jnp
from jax import lax
from jax.experimental import pallas as pl
from jax.experimental.pallas import tpu as pltpu


def _round_up(a, b):
    return (a + b - 1) // b * b


def _vmem_capacity_bytes():
    try:
        info = pltpu.get_tpu_info()
        cap = getattr(info, "vmem_capacity_bytes", None)
        if cap:
            return int(cap)
    except Exception:
        pass
    return 64 * 1024 * 1024  # conservative fallback: v7x per-TensorCore VMEM


def _patch_embed_kernel(p_ref, w_ref, params_ref, o_ref):
    # p_ref:      (TM, K)  im2col patch rows (compute dtype)
    # w_ref:      (K,  E)  conv weight as projection matrix
    # params_ref: (3,  E)  f32 rows: [conv bias, LN gamma, LN beta]
    # o_ref:      (TM, E)  normalized embeddings
    y = jnp.dot(p_ref[...], w_ref[...], preferred_element_type=jnp.float32)
    params = params_ref[...]
    y = y + params[0:1, :]                        # conv bias (before LN stats)

    # LayerNorm over the embed dim, eps = 1e-5 (PyTorch default), all in f32.
    # rsqrt lands on the EUP slot -> epilogue is ~free once tile_m is large.
    mean = jnp.mean(y, axis=-1, keepdims=True)
    centered = y - mean
    var = jnp.mean(centered * centered, axis=-1, keepdims=True)
    y_hat = centered * lax.rsqrt(var + 1e-5)
    o_ref[...] = (y_hat * params[1:2, :] + params[2:3, :]).astype(o_ref.dtype)


def overlap_patch_embed(x, conv_w, conv_b, ln_w, ln_b, *, stride,
                        tile_m=1024, compute_dtype=jnp.bfloat16):
    """x: (B, C, H, W) NCHW.  conv_w: (E, C, kh, kw).

    Returns ((B, Hout*Wout, E), Hout, Wout).
    """
    B, C, H, W = x.shape
    E, Cw, kh, kw = conv_w.shape
    assert Cw == C
    ph, pw = kh // 2, kw // 2
    Hout = (H + 2 * ph - kh) // stride + 1
    Wout = (W + 2 * pw - kw) // stride + 1
    M = B * Hout * Wout
    K = C * kh * kw

    # im2col in one XLA op, channels-last output so K is already the lane
    # (last) dim. Feature ordering is channel-major (c*kh*kw + ki*kw + kj),
    # matching conv_w.reshape(E, C*kh*kw); the f32 parity test in __main__
    # validates this ordering end-to-end.
    # x (small) is cast to the compute dtype first so the big slab is narrow.
    patches = lax.conv_general_dilated_patches(
        x.astype(compute_dtype),
        filter_shape=(kh, kw), window_strides=(stride, stride),
        padding=[(ph, ph), (pw, pw)],
        dimension_numbers=("NCHW", "OIHW", "NHWC"),
    ).reshape(M, K)

    w_mat = conv_w.reshape(E, K).T.astype(compute_dtype)            # (K, E)
    params = jnp.stack([conv_b, ln_w, ln_b]).astype(jnp.float32)    # (3, E)

    # ---- tile-size / VMEM budgeting (chip-aware) ----
    in_bytes = jnp.dtype(compute_dtype).itemsize
    out_bytes = jnp.dtype(x.dtype).itemsize
    K_lane = _round_up(K, 128)      # lane-padded VMEM footprint
    E_lane = _round_up(E, 128)

    def _vmem_est(tm_):
        return (2 * tm_ * K_lane * in_bytes        # patch tiles (double-buffered)
                + 1 * K_lane * E_lane * in_bytes   # weight (single-buffered)
                + 2 * tm_ * E_lane * out_bytes     # output tiles (double-buffered)
                + 3 * tm_ * E_lane * 4             # f32 LN intermediates
                + 3 * E_lane * 4)                  # params

    vmem_cap = _vmem_capacity_bytes()
    vmem_budget = min(int(vmem_cap * 0.62), 96 * 1024 * 1024)

    tm = max(128, min(_round_up(tile_m, 128), _round_up(M, 128)))
    while tm > 128 and _vmem_est(tm) > vmem_budget:
        tm = _round_up(tm // 2, 128)
    # Keep pipeline depth / v7x 2-TensorCore sharding when M allows it.
    while tm > 256 and (M + tm - 1) // tm < 8:
        tm = _round_up(tm // 2, 128)

    grid_m = pl.cdiv(M, tm)
    vmem_limit = int(min(max(_vmem_est(tm) + 8 * 1024 * 1024, 32 * 1024 * 1024),
                         int(vmem_cap * 0.70)))

    # NOTE: when E < 128 (tiny early stages) the epilogue store is lane-masked;
    # the large-E stages (128/320/512) are lane-dense and unaffected.
    def _build_and_run(single_buffer_invariants):
        def invariant_spec(shape):
            kwargs = {}
            if single_buffer_invariants:
                kwargs["pipeline_mode"] = pl.Buffered(1)
            return pl.BlockSpec(shape, lambda i: (0,) * len(shape), **kwargs)

        return pl.pallas_call(
            _patch_embed_kernel,
            out_shape=jax.ShapeDtypeStruct((M, E), x.dtype),
            grid_spec=pltpu.PrefetchScalarGridSpec(
                num_scalar_prefetch=0,
                grid=(grid_m,),
                in_specs=[
                    pl.BlockSpec((tm, K), lambda i: (i, 0)),
                    invariant_spec((K, E)),
                    invariant_spec((3, E)),
                ],
                out_specs=pl.BlockSpec((tm, E), lambda i: (i, 0)),
            ),
            compiler_params=pltpu.CompilerParams(
                dimension_semantics=("parallel",),
                vmem_limit_bytes=vmem_limit),
        )(patches, w_mat, params)

    try:
        out = _build_and_run(True)
    except Exception:
        # Fallback for jax versions without BlockSpec(pipeline_mode=...) /
        # pl.Buffered(1): default double-buffering of the invariant operands.
        out = _build_and_run(False)

    return out.reshape(B, Hout * Wout, E), Hout, Wout


if __name__ == "__main__":
    # Small config consistent with the module: img=16, patch=7, stride=4,
    # in_chans=4, embed_dim=32, batch=2  ->  Hout = Wout = 4, num_patches = 16.
    B, C, H, W = 2, 4, 16, 16
    patch_size, stride, embed_dim = 7, 4, 32

    key = jax.random.PRNGKey(0)
    kx, kw = jax.random.split(key)

    x = jax.random.normal(kx, (B, C, H, W), dtype=jnp.float32)

    # Deterministic init mirroring _init_weights:
    # Conv2d: normal(0, sqrt(2/fan_out)), fan_out = kh*kw*embed_dim; bias = 0.
    fan_out = patch_size * patch_size * embed_dim
    conv_w = jax.random.normal(
        kw, (embed_dim, C, patch_size, patch_size), dtype=jnp.float32
    ) * math.sqrt(2.0 / fan_out)
    conv_b = jnp.zeros((embed_dim,), dtype=jnp.float32)
    # LayerNorm: weight = 1, bias = 0.
    ln_w = jnp.ones((embed_dim,), dtype=jnp.float32)
    ln_b = jnp.zeros((embed_dim,), dtype=jnp.float32)

    # Reference (conv + layernorm) in plain JAX to validate semantics.
    ref_conv = lax.conv_general_dilated(
        x, conv_w, window_strides=(stride, stride),
        padding=[(patch_size // 2, patch_size // 2)] * 2,
        dimension_numbers=("NCHW", "OIHW", "NCHW"),
    ) + conv_b[None, :, None, None]
    ref = ref_conv.reshape(B, embed_dim, -1).transpose(0, 2, 1)
    mu = ref.mean(-1, keepdims=True)
    var = ((ref - mu) ** 2).mean(-1, keepdims=True)
    ref = (ref - mu) / jnp.sqrt(var + 1e-5) * ln_w + ln_b

    # 1) f32 MXU operands: tight semantics (and im2col feature-ordering) check.
    out32, Hout, Wout = overlap_patch_embed(
        x, conv_w, conv_b, ln_w, ln_b, stride=stride,
        compute_dtype=jnp.float32)
    out32 = jax.block_until_ready(out32)
    assert out32.shape == (B, Hout * Wout, embed_dim)
    assert jnp.allclose(out32, ref, atol=1e-4, rtol=1e-4)

    # 2) Default bf16 MXU operands (f32 accumulation + f32 LayerNorm): looser check.
    out_bf, _, _ = overlap_patch_embed(
        x, conv_w, conv_b, ln_w, ln_b, stride=stride)
    out_bf = jax.block_until_ready(out_bf)
    assert out_bf.shape == (B, Hout * Wout, embed_dim)
    assert jnp.allclose(out_bf, ref, atol=0.2, rtol=0.2)

    print("KERNEL_OK")
</pallas_src>

<mosaic_0001>
module attributes {stable_mosaic.version = 11 : i64} {
  func.func @_patch_embed_kernel(%arg0: i32, %arg1: memref<128x196xf32, #tpu.memory_space<vmem>>, %arg2: memref<196x32xf32, #tpu.memory_space<vmem>>, %arg3: memref<3x32xf32, #tpu.memory_space<vmem>>, %arg4: memref<128x32xf32, #tpu.memory_space<vmem>>) attributes {dimension_semantics = [#tpu.dimension_semantics<parallel>], iteration_bounds = array<i64: 1>, scalar_prefetch = 0 : i64, scratch_operands = 0 : i64, tpu.core_type = #tpu.core_type<tc>, window_params = [{transform_indices = @transform_0, window_bounds = array<i64: 128, 196>}, {pipeline_mode = #tpu.pipeline_mode<synchronous>, transform_indices = @transform_1, window_bounds = array<i64: 196, 32>}, {pipeline_mode = #tpu.pipeline_mode<synchronous>, transform_indices = @transform_2, window_bounds = array<i64: 3, 32>}, {transform_indices = @transform_3, window_bounds = array<i64: 128, 32>}]} {
    %c0 = arith.constant 0 : index
    %c0_0 = arith.constant 0 : index
    %0 = vector.load %arg1[%c0, %c0_0] : memref<128x196xf32, #tpu.memory_space<vmem>>, vector<128x196xf32>
    %c0_1 = arith.constant 0 : index
    %c0_2 = arith.constant 0 : index
    %1 = vector.load %arg2[%c0_1, %c0_2] : memref<196x32xf32, #tpu.memory_space<vmem>>, vector<196x32xf32>
    %cst = arith.constant dense<0.000000e+00> : vector<128x32xf32>
    %2 = tpu.matmul %0, %1, %cst {dimension_numbers = #tpu.dot_dimension_numbers<[1], [0], [0], [1], [0, 0, 1, 1], [], []>} : vector<128x196xf32>, vector<196x32xf32>, vector<128x32xf32> -> vector<128x32xf32>
    %c0_3 = arith.constant 0 : index
    %c0_4 = arith.constant 0 : index
    %3 = vector.load %arg3[%c0_3, %c0_4] : memref<3x32xf32, #tpu.memory_space<vmem>>, vector<3x32xf32>
    %4 = vector.extract_strided_slice %3 {offsets = [0, 0], sizes = [1, 32], strides = [1, 1]} : vector<3x32xf32> to vector<1x32xf32>
    %5 = vector.broadcast %4 : vector<1x32xf32> to vector<128x32xf32>
    %6 = arith.addf %2, %5 : vector<128x32xf32>
    %cst_5 = arith.constant dense<0.000000e+00> : vector<128xf32>
    %7 = vector.multi_reduction <add>, %6, %cst_5 [1] : vector<128x32xf32> to vector<128xf32>
    %8 = vector.shape_cast %7 : vector<128xf32> to vector<128x1xf32>
    %cst_6 = arith.constant 3.200000e+01 : f32
    %9 = vector.broadcast %cst_6 : f32 to vector<128x1xf32>
    %10 = arith.divf %8, %9 : vector<128x1xf32>
    %11 = vector.broadcast %10 : vector<128x1xf32> to vector<128x32xf32>
    %12 = arith.subf %6, %11 : vector<128x32xf32>
    %13 = arith.mulf %12, %12 : vector<128x32xf32>
    %cst_7 = arith.constant dense<0.000000e+00> : vector<128xf32>
    %14 = vector.multi_reduction <add>, %13, %cst_7 [1] : vector<128x32xf32> to vector<128xf32>
    %15 = vector.shape_cast %14 : vector<128xf32> to vector<128x1xf32>
    %cst_8 = arith.constant 3.200000e+01 : f32
    %16 = vector.broadcast %cst_8 : f32 to vector<128x1xf32>
    %17 = arith.divf %15, %16 : vector<128x1xf32>
    %cst_9 = arith.constant 9.99999974E-6 : f32
    %18 = vector.broadcast %cst_9 : f32 to vector<128x1xf32>
    %19 = arith.addf %17, %18 : vector<128x1xf32>
    %20 = math.rsqrt %19 : vector<128x1xf32>
    %21 = vector.broadcast %20 : vector<128x1xf32> to vector<128x32xf32>
    %22 = arith.mulf %12, %21 : vector<128x32xf32>
    %23 = vector.extract_strided_slice %3 {offsets = [1, 0], sizes = [1, 32], strides = [1, 1]} : vector<3x32xf32> to vector<1x32xf32>
    %24 = vector.broadcast %23 : vector<1x32xf32> to vector<128x32xf32>
    %25 = arith.mulf %22, %24 : vector<128x32xf32>
    %26 = vector.extract_strided_slice %3 {offsets = [2, 0], sizes = [1, 32], strides = [1, 1]} : vector<3x32xf32> to vector<1x32xf32>
    %27 = vector.broadcast %26 : vector<1x32xf32> to vector<128x32xf32>
    %28 = arith.addf %25, %27 : vector<128x32xf32>
    %c0_10 = arith.constant 0 : index
    %c0_11 = arith.constant 0 : index
    %29 = vector.load %arg4[%c0_10, %c0_11] : memref<128x32xf32, #tpu.memory_space<vmem>>, vector<128x32xf32>
    tpu.vector_store %arg4[%c0_10, %c0_11], %28 {strides = array<i32>} : memref<128x32xf32, #tpu.memory_space<vmem>>, vector<128x32xf32>,
    return
  }
  func.func @transform_0(%arg0: i32) -> (i32, i32) {
    %c0_i32 = arith.constant 0 : i32
    %c0_i32_0 = arith.constant 0 : i32
    return %arg0, %c0_i32 : i32, i32
  }
  func.func @transform_1(%arg0: i32) -> (i32, i32) {
    %c0_i32 = arith.constant 0 : i32
    %c0_i32_0 = arith.constant 0 : i32
    %c0_i32_1 = arith.constant 0 : i32
    return %c0_i32, %c0_i32_0 : i32, i32
  }
  func.func @transform_2(%arg0: i32) -> (i32, i32) {
    %c0_i32 = arith.constant 0 : i32
    %c0_i32_0 = arith.constant 0 : i32
    %c0_i32_1 = arith.constant 0 : i32
    return %c0_i32, %c0_i32_0 : i32, i32
  }
  func.func @transform_3(%arg0: i32) -> (i32, i32) {
    %c0_i32 = arith.constant 0 : i32
    %c0_i32_0 = arith.constant 0 : i32
    return %arg0, %c0_i32 : i32, i32
  }
}

module attributes {stable_mosaic.version = 11 : i64} {
  func.func @_patch_embed_kernel(%arg0: i32, %arg1: memref<128x196xf32, #tpu.memory_space<vmem>>, %arg2: memref<196x32xf32, #tpu.memory_space<vmem>>, %arg3: memref<3x32xf32, #tpu.memory_space<vmem>>, %arg4: memref<128x32xf32, #tpu.memory_space<vmem>>) attributes {dimension_semantics = [#tpu.dimension_semantics<parallel>], iteration_bounds = array<i64: 1>, scalar_prefetch = 0 : i64, scratch_operands = 0 : i64, tpu.core_type = #tpu.core_type<tc>, window_params = [{transform_indices = @transform_0, window_bounds = array<i64: 128, 196>}, {pipeline_mode = #tpu.pipeline_mode<synchronous>, transform_indices = @transform_1, window_bounds = array<i64: 196, 32>}, {pipeline_mode = #tpu.pipeline_mode<synchronous>, transform_indices = @transform_2, window_bounds = array<i64: 3, 32>}, {transform_indices = @transform_3, window_bounds = array<i64: 128, 32>}]} {
    %c0 = arith.constant 0 : index
    %c0_0 = arith.constant 0 : index
    %0 = vector.load %arg1[%c0, %c0_0] : memref<128x196xf32, #tpu.memory_space<vmem>>, vector<128x196xf32>
    %c0_1 = arith.constant 0 : index
    %c0_2 = arith.constant 0 : index
    %1 = vector.load %arg2[%c0_1, %c0_2] : memref<196x32xf32, #tpu.memory_space<vmem>>, vector<196x32xf32>
    %cst = arith.constant dense<0.000000e+00> : vector<128x32xf32>
    %2 = tpu.matmul %0, %1, %cst {dimension_numbers = #tpu.dot_dimension_numbers<[1], [0], [0], [1], [0, 0, 1, 1], [], []>} : vector<128x196xf32>, vector<196x32xf32>, vector<128x32xf32> -> vector<128x32xf32>
    %c0_3 = arith.constant 0 : index
    %c0_4 = arith.constant 0 : index
    %3 = vector.load %arg3[%c0_3, %c0_4] : memref<3x32xf32, #tpu.memory_space<vmem>>, vector<3x32xf32>
    %4 = vector.extract_strided_slice %3 {offsets = [0, 0], sizes = [1, 32], strides = [1, 1]} : vector<3x32xf32> to vector<1x32xf32>
    %5 = vector.broadcast %4 : vector<1x32xf32> to vector<128x32xf32>
    %6 = arith.addf %2, %5 : vector<128x32xf32>
    %cst_5 = arith.constant dense<0.000000e+00> : vector<128xf32>
    %7 = vector.multi_reduction <add>, %6, %cst_5 [1] : vector<128x32xf32> to vector<128xf32>
    %8 = vector.shape_cast %7 : vector<128xf32> to vector<128x1xf32>
    %cst_6 = arith.constant 3.200000e+01 : f32
    %9 = vector.broadcast %cst_6 : f32 to vector<128x1xf32>
    %10 = arith.divf %8, %9 : vector<128x1xf32>
    %11 = vector.broadcast %10 : vector<128x1xf32> to vector<128x32xf32>
    %12 = arith.subf %6, %11 : vector<128x32xf32>
    %13 = arith.mulf %12, %12 : vector<128x32xf32>
    %cst_7 = arith.constant dense<0.000000e+00> : vector<128xf32>
    %14 = vector.multi_reduction <add>, %13, %cst_7 [1] : vector<128x32xf32> to vector<128xf32>
    %15 = vector.shape_cast %14 : vector<128xf32> to vector<128x1xf32>
    %cst_8 = arith.constant 3.200000e+01 : f32
    %16 = vector.broadcast %cst_8 : f32 to vector<128x1xf32>
    %17 = arith.divf %15, %16 : vector<128x1xf32>
    %cst_9 = arith.constant 9.99999974E-6 : f32
    %18 = vector.broadcast %cst_9 : f32 to vector<128x1xf32>
    %19 = arith.addf %17, %18 : vector<128x1xf32>
    %20 = math.rsqrt %19 : vector<128x1xf32>
    %21 = vector.broadcast %20 : vector<128x1xf32> to vector<128x32xf32>
    %22 = arith.mulf %12, %21 : vector<128x32xf32>
    %23 = vector.extract_strided_slice %3 {offsets = [1, 0], sizes = [1, 32], strides = [1, 1]} : vector<3x32xf32> to vector<1x32xf32>
    %24 = vector.broadcast %23 : vector<1x32xf32> to vector<128x32xf32>
    %25 = arith.mulf %22, %24 : vector<128x32xf32>
    %26 = vector.extract_strided_slice %3 {offsets = [2, 0], sizes = [1, 32], strides = [1, 1]} : vector<3x32xf32> to vector<1x32xf32>
    %27 = vector.broadcast %26 : vector<1x32xf32> to vector<128x32xf32>
    %28 = arith.addf %25, %27 : vector<128x32xf32>
    %c0_10 = arith.constant 0 : index
    %c0_11 = arith.constant 0 : index
    %29 = vector.load %arg4[%c0_10, %c0_11] : memref<128x32xf32, #tpu.memory_space<vmem>>, vector<128x32xf32>
    tpu.vector_store %arg4[%c0_10, %c0_11], %28 {strides = array<i32>} : memref<128x32xf32, #tpu.memory_space<vmem>>, vector<128x32xf32>,
    return
  }
  func.func @transform_0(%arg0: i32) -> (i32, i32) {
    %c0_i32 = arith.constant 0 : i32
    %c0_i32_0 = arith.constant 0 : i32
    return %arg0, %c0_i32 : i32, i32
  }
  func.func @transform_1(%arg0: i32) -> (i32, i32) {
    %c0_i32 = arith.constant 0 : i32
    %c0_i32_0 = arith.constant 0 : i32
    %c0_i32_1 = arith.constant 0 : i32
    return %c0_i32, %c0_i32_0 : i32, i32
  }
  func.func @transform_2(%arg0: i32) -> (i32, i32) {
    %c0_i32 = arith.constant 0 : i32
    %c0_i32_0 = arith.constant 0 : i32
    %c0_i32_1 = arith.constant 0 : i32
    return %c0_i32, %c0_i32_0 : i32, i32
  }
  func.func @transform_3(%arg0: i32) -> (i32, i32) {
    %c0_i32 = arith.constant 0 : i32
    %c0_i32_0 = arith.constant 0 : i32
    return %arg0, %c0_i32 : i32, i32
  }
}

</mosaic_0001>

<llo_original>
// kernel: tpu_custom_call.1
$region0: #{tpu_custom_call.1}
  #allocation0 [shape = 'u32[]', space=smem, size = 0x4, offset = 0x4, fixed_abs, tag = 'smem constant byte address 0x4 - core index']
  #allocation1 [shape = 'u32[144,128]{1,0:T(1,128)}', space=vmem, size = 0x12000, scoped, tag = 'internal scratch']
  %s0 = inlined_call_operand.vmem [shape: f32[32,196], index: 0, kind: input, shape index: {}]
  %s1 = inlined_call_operand.vmem [shape: f32[196,32], index: 1, kind: input, shape index: {}]
  %s2 = inlined_call_operand.vmem [shape: f32[3,32], index: 2, kind: input, shape index: {}]
  %s3 = inlined_call_operand.hbm [shape: f32[32,32], index: 3, kind: output, shape index: {}]
  %s4 = sld [smem:[#allocation0]]
  $region22: #{tpu_custom_call.1} parent=0
    _
  %s6 = ssub.s32 1, %s4
  %s7 = scalar_select 0, %s6, %s4
  $region1: #{tpu_custom_call.1} parent=0
    #allocation2 [shape = 'u8[65536]{0}', space=vmem, size = 0x10000, scoped, tag = 'output window, operand 0, single buffered']
    #allocation3 [shape = 's32[1]{0}', space=sflag, size = 0x4, scoped, tag = 'scoped memory for tpu_custom_call.1']
    %8 = vsyncpa [#allocation3], 0
    // Predicated region
    $region2: #{tpu_custom_call.1} parent=1 // pred_check
      _
    $region3: #{tpu_custom_call.1} parent=1 // pred_check_branch
      %10 = sbr.rel (0) target = $region5
    $region4: #{tpu_custom_call.1} parent=1 // pred_region
      _
    $region5: #{tpu_custom_call.1} parent=1 // pred_fallthru
      _
    // Predicated region
    $region6: #{tpu_custom_call.1} parent=1 // pred_check
      _
    $region7: #{tpu_custom_call.1} parent=1 // pred_check_branch
      %12 = sbr.rel (0) target = $region9
    $region8: #{tpu_custom_call.1} parent=1 // pred_region
      _
    $region9: #{tpu_custom_call.1} parent=1 // pred_fallthru
      _
    // Predicated region
    $region10: #{tpu_custom_call.1} parent=1 // pred_check
      _
    $region11: #{tpu_custom_call.1} parent=1 // pred_check_branch
      %14 = sbr.rel (0) target = $region13
    $region12: #{tpu_custom_call.1} parent=1 // pred_region
      _
    $region13: #{tpu_custom_call.1} parent=1 // pred_fallthru
      _
    %v15 = vld [vmem:[%s0] sm:$0xff]
    %v16 = vld [vmem:[%s0 + $0x8] sm:$0xff]
    %v17 = vld [vmem:[%s0 + $0x10] sm:$0xff]
    %v18 = vld [vmem:[%s0 + $0x18] sm:$0xff]
    %v19 = vld [vmem:[%s0 + $0x20] sm:$0xff]
    %v20 = vld [vmem:[%s0 + $0x28] sm:$0xff]
    %v21 = vld [vmem:[%s0 + $0x30] sm:$0xff]
    %v22 = vld [vmem:[%s0 + $0x38] sm:$0xff]
    %v23 = vld [vmem:[%s0 + $0x40] sm:$0xff]
    %v24 = vld [vmem:[%s0 + $0x48] sm:$0xff]
    %v25 = vld [vmem:[%s0 + $0x50] sm:$0xff]
    %v26 = vld [vmem:[%s0 + $0x58] sm:$0xff]
    %v27 = vld [vmem:[%s0 + $0x60] sm:$0xff]
    %v28 = vld [vmem:[%s0 + $0x68] sm:$0xff]
    %v29 = vld [vmem:[%s0 + $0x70] sm:$0xff]
    %v30 = vld [vmem:[%s0 + $0x78] sm:$0xff]
    %v31 = vld [vmem:[%s0 + $0x80] sm:$0xff]
    %v32 = vld [vmem:[%s0 + $0x88] sm:$0xff]
    %v33 = vld [vmem:[%s0 + $0x90] sm:$0xff]
    %v34 = vld [vmem:[%s0 + $0x98] sm:$0xff]
    %v35 = vld [vmem:[%s0 + $0xa0] sm:$0xff]
    %v36 = vld [vmem:[%s0 + $0xa8] sm:$0xff]
    %v37 = vld [vmem:[%s0 + $0xb0] sm:$0xff]
    %v38 = vld [vmem:[%s0 + $0xb8] sm:$0xff]
    %v39 = vld [vmem:[%s0 + $0xc0] sm:$0xff]
    %v40 = vld [vmem:[%s0 + $0xc8] sm:$0xff]
    %v41 = vld [vmem:[%s0 + $0xd0] sm:$0xff]
    %v42 = vld [vmem:[%s0 + $0xd8] sm:$0xff]
    %v43 = vld [vmem:[%s0 + $0xe0] sm:$0xff]
    %v44 = vld [vmem:[%s0 + $0xe8] sm:$0xff]
    %v45 = vld [vmem:[%s0 + $0xf0] sm:$0xff]
    %v46 = vld [vmem:[%s0 + $0xf8] sm:$0xff]
    %v47 = vld [vmem:[%s1] sm:$0xff]
    %v48 = vld [vmem:[%s1 + $0x8] sm:$0xff]
    %v49 = vld [vmem:[%s1 + $0x10] sm:$0xff]
    %v50 = vld [vmem:[%s1 + $0x18] sm:$0xff]
    %v51 = vld [vmem:[%s1 + $0x20] sm:$0xff]
    %v52 = vld [vmem:[%s1 + $0x28] sm:$0xff]
    %v53 = vld [vmem:[%s1 + $0x30] sm:$0xff]
    %v54 = vld [vmem:[%s1 + $0x38] sm:$0xff]
    %v55 = vld [vmem:[%s1 + $0x40] sm:$0xff]
    %v56 = vld [vmem:[%s1 + $0x48] sm:$0xff]
    %v57 = vld [vmem:[%s1 + $0x50] sm:$0xff]
    %v58 = vld [vmem:[%s1 + $0x58] sm:$0xff]
    %v59 = vld [vmem:[%s1 + $0x60] sm:$0xff]
    %v60 = vld [vmem:[%s1 + $0x68] sm:$0xff]
    %v61 = vld [vmem:[%s1 + $0x70] sm:$0xff]
    %v62 = vld [vmem:[%s1 + $0x78] sm:$0xff]
    %v63 = vld [vmem:[%s1 + $0x80] sm:$0xff]
    %v64 = vld [vmem:[%s1 + $0x88] sm:$0xff]
    %v65 = vld [vmem:[%s1 + $0x90] sm:$0xff]
    %v66 = vld [vmem:[%s1 + $0x98] sm:$0xff]
    %v67 = vld [vmem:[%s1 + $0xa0] sm:$0xff]
    %v68 = vld [vmem:[%s1 + $0xa8] sm:$0xff]
    %v69 = vld [vmem:[%s1 + $0xb0] sm:$0xff]
    %v70 = vld [vmem:[%s1 + $0xb8] sm:$0xff]
    %v71 = vld [vmem:[%s1 + $0xc0] sm:$0xf]
    %v72 = vld [vmem:[%s2] sm:$0x7]
    %v73 = vlaneseq
    %v74 = vshrl.u32 %v73, 7
    %v75 = vsub.s32 0, %v74
    %v76 = vrot.slane %v72, %v75
    %vm77 = vcmask 556032
    %v79 = vsel %vm77, %v16, 0
    %v82 = vsel %vm77, %v18, 0
    %v85 = vsel %vm77, %v20, 0
    %v88 = vsel %vm77, %v22, 0
    %v91 = vsel %vm77, %v24, 0
    %v94 = vsel %vm77, %v26, 0
    %v97 = vsel %vm77, %v28, 0
    %v100 = vsel %vm77, %v30, 0
    %v103 = vsel %vm77, %v32, 0
    %v106 = vsel %vm77, %v34, 0
    %v109 = vsel %vm77, %v36, 0
    %v112 = vsel %vm77, %v38, 0
    %v115 = vsel %vm77, %v40, 0
    %v118 = vsel %vm77, %v42, 0
    %v121 = vsel %vm77, %v44, 0
    %v124 = vsel %vm77, %v46, 0
    %vm126 = vcmask 1043456
    %v128 = vsel %vm126, %v71, 0
    %130 = vmatprep.subr.mxu0 0.0
    %131 = vmatpush1.msra.mxu0 %v47
    %132 = vmatprep.subr.mxu0 0.0
    %133 = vmatpush1.msra.mxu0 %v48
    %134 = vmatprep.subr.mxu0 0.0
    %135 = vmatpush1.msra.mxu0 %v49
    %136 = vmatprep.subr.mxu0 0.0
    %137 = vmatpush1.msra.mxu0 %v50
    %138 = vmatprep.subr.mxu0 0.0
    %139 = vmatpush1.msra.mxu0 %v51
    %140 = vmatprep.subr.mxu0 0.0
    %141 = vmatpush1.msra.mxu0 %v52
    %142 = vmatprep.subr.mxu0 0.0
    %143 = vmatpush1.msra.mxu0 %v53
    %144 = vmatprep.subr.mxu0 0.0
    %145 = vmatpush1.msra.mxu0 %v54
    %146 = vmatprep.subr.mxu0 0.0
    %147 = vmatpush1.msra.mxu0 %v55
    %148 = vmatprep.subr.mxu0 0.0
    %149 = vmatpush1.msra.mxu0 %v56
    %150 = vmatprep.subr.mxu0 0.0
    %151 = vmatpush1.msra.mxu0 %v57
    %152 = vmatprep.subr.mxu0 0.0
    %153 = vmatpush1.msra.mxu0 %v58
    %154 = vmatprep.subr.mxu0 0.0
    %155 = vmatpush1.msra.mxu0 %v59
    %156 = vmatprep.subr.mxu0 0.0
    %157 = vmatpush1.msra.mxu0 %v60
    %158 = vmatprep.subr.mxu0 0.0
    %159 = vmatpush1.msra.mxu0 %v61
    %160 = vmatprep.subr.mxu0 0.0
    %161 = vmatpush1.msra.mxu0 %v62
    %162 = vmatprep.subr.mxu0 0.0
    %163 = vmatpush1.msra.mxu0 %v63
    %164 = vmatprep.subr.mxu0 0.0
    %165 = vmatpush1.msra.mxu0 %v64
    %166 = vmatprep.subr.mxu0 0.0
    %167 = vmatpush1.msra.mxu0 %v65
    %168 = vmatprep.subr.mxu0 0.0
    %169 = vmatpush1.msra.mxu0 %v66
    %170 = vmatprep.subr.mxu0 0.0
    %171 = vmatpush1.msra.mxu0 %v67
    %172 = vmatprep.subr.mxu0 0.0
    %173 = vmatpush1.msra.mxu0 %v68
    %174 = vmatprep.subr.mxu0 0.0
    %175 = vmatpush1.msra.mxu0 %v69
    %176 = vmatprep.subr.mxu0 0.0
    %177 = vmatpush1.msra.mxu0 %v70
    %178 = vmatprep.subr.mxu0 0.0
    %179 = vmatpush1.msra.mxu0 %v128
    %180 = vmatprep.subr.mxu0 0.0
    %181 = vmatpush1.msra.mxu0 0.0
    %182 = vmatprep.subr.mxu0 0.0
    %183 = vmatpush1.msra.mxu0 0.0
    %184 = vmatprep.subr.mxu0 0.0
    %185 = vmatpush1.msra.mxu0 0.0
    %186 = vmatprep.subr.mxu0 0.0
    %187 = vmatpush1.msra.mxu0 0.0
    %188 = vmatprep.subr.mxu0 0.0
    %189 = vmatpush1.msra.mxu0 0.0
    %190 = vmatprep.subr.mxu0 0.0
    %191 = vmatpush1.msra.mxu0 0.0
    %192 = vmatprep.subr.mxu0 0.0
    %193 = vmatpush1.msra.mxu0 0.0
    %194 = vmatprep.mubr.f32.mxu0 %v79
    %195 = vmatmul.mubr.f32.gmra.mrb[0].mxu0 %v15
    %v196 = vpop.f32.mrb[0].mxu0
    %v197 = vadd.f32 %v76, %v196
    %v198 = vpop.f32.mrb[0].mxu0
    %199 = vmatprep.mubr.f32.mxu0 %v82
    %200 = vmatmul.mubr.f32.gmra.mrb[0].mxu0 %v17
    %v201 = vpop.f32.mrb[0].mxu0
    %v202 = vadd.f32 %v76, %v201
    %v203 = vpop.f32.mrb[0].mxu0
    %204 = vmatprep.mubr.f32.mxu0 %v85
    %205 = vmatmul.mubr.f32.gmra.mrb[0].mxu0 %v19
    %v206 = vpop.f32.mrb[0].mxu0
    %v207 = vadd.f32 %v76, %v206
    %v208 = vpop.f32.mrb[0].mxu0
    %209 = vmatprep.mubr.f32.mxu0 %v88
    %210 = vmatmul.mubr.f32.gmra.mrb[0].mxu0 %v21
    %v211 = vpop.f32.mrb[0].mxu0
    %v212 = vadd.f32 %v76, %v211
    %v213 = vpop.f32.mrb[0].mxu0
    %214 = vmatprep.mubr.f32.mxu0 %v91
    %215 = vmatmul.mubr.f32.gmra.mrb[0].mxu0 %v23
    %v216 = vpop.f32.mrb[0].mxu0
    %v217 = vadd.f32 %v76, %v216
    %v218 = vpop.f32.mrb[0].mxu0
    %219 = vmatprep.mubr.f32.mxu0 %v94
    %220 = vmatmul.mubr.f32.gmra.mrb[0].mxu0 %v25
    %v221 = vpop.f32.mrb[0].mxu0
    %v222 = vadd.f32 %v76, %v221
    %v223 = vpop.f32.mrb[0].mxu0
    %224 = vmatprep.mubr.f32.mxu0 %v97
    %225 = vmatmul.mubr.f32.gmra.mrb[0].mxu0 %v27
    %v226 = vpop.f32.mrb[0].mxu0
    %v227 = vadd.f32 %v76, %v226
    %v228 = vpop.f32.mrb[0].mxu0
    %229 = vmatprep.mubr.f32.mxu0 %v100
    %230 = vmatmul.mubr.f32.gmra.mrb[0].mxu0 %v29
    %v231 = vpop.f32.mrb[0].mxu0
    %v232 = vadd.f32 %v76, %v231
    %v233 = vpop.f32.mrb[0].mxu0
    %234 = vmatprep.mubr.f32.mxu0 %v103
    %235 = vmatmul.mubr.f32.gmra.mrb[0].mxu0 %v31
    %v236 = vpop.f32.mrb[0].mxu0
    %v237 = vadd.f32 %v76, %v236
    %v238 = vpop.f32.mrb[0].mxu0
    %239 = vmatprep.mubr.f32.mxu0 %v106
    %240 = vmatmul.mubr.f32.gmra.mrb[0].mxu0 %v33
    %v241 = vpop.f32.mrb[0].mxu0
    %v242 = vadd.f32 %v76, %v241
    %v243 = vpop.f32.mrb[0].mxu0
    %244 = vmatprep.mubr.f32.mxu0 %v109
    %245 = vmatmul.mubr.f32.gmra.mrb[0].mxu0 %v35
    %v246 = vpop.f32.mrb[0].mxu0
    %v247 = vadd.f32 %v76, %v246
    %v248 = vpop.f32.mrb[0].mxu0
    %249 = vmatprep.mubr.f32.mxu0 %v112
    %250 = vmatmul.mubr.f32.gmra.mrb[0].mxu0 %v37
    %v251 = vpop.f32.mrb[0].mxu0
    %v252 = vadd.f32 %v76, %v251
    %v253 = vpop.f32.mrb[0].mxu0
    %254 = vmatprep.mubr.f32.mxu0 %v115
    %255 = vmatmul.mubr.f32.gmra.mrb[0].mxu0 %v39
    %v256 = vpop.f32.mrb[0].mxu0
    %v257 = vadd.f32 %v76, %v256
    %v258 = vpop.f32.mrb[0].mxu0
    %259 = vmatprep.mubr.f32.mxu0 %v118
    %260 = vmatmul.mubr.f32.gmra.mrb[0].mxu0 %v41
    %v261 = vpop.f32.mrb[0].mxu0
    %v262 = vadd.f32 %v76, %v261
    %v263 = vpop.f32.mrb[0].mxu0
    %264 = vmatprep.mubr.f32.mxu0 %v121
    %265 = vmatmul.mubr.f32.gmra.mrb[0].mxu0 %v43
    %v266 = vpop.f32.mrb[0].mxu0
    %v267 = vadd.f32 %v76, %v266
    %v268 = vpop.f32.mrb[0].mxu0
    %269 = vmatprep.mubr.f32.mxu0 %v124
    %270 = vmatmul.mubr.f32.gmra.mrb[0].mxu0 %v45
    %v271 = vpop.f32.mrb[0].mxu0
    %v272 = vadd.f32 %v76, %v271
    %v273 = vpop.f32.mrb[0].mxu0
    %274 = vdwg.mxu0
    %vm275 = vcmask 261120
    %v276 = vsel %vm275, %v197, 0.0
    %277 = vadd.xlane.f32.xlu0 %v276
    %v278 = vpop.xlane.xlu0 %277
    %v279 = vsel %vm275, %v202, 0.0
    %280 = vadd.xlane.f32.xlu0 %v279
    %v281 = vpop.xlane.xlu0 %280
    %v282 = vsel %vm275, %v207, 0.0
    %283 = vadd.xlane.f32.xlu0 %v282
    %v284 = vpop.xlane.xlu0 %283
    %v285 = vsel %vm275, %v212, 0.0
    %286 = vadd.xlane.f32.xlu0 %v285
    %v287 = vpop.xlane.xlu0 %286
    %v288 = vsel %vm275, %v217, 0.0
    %289 = vadd.xlane.f32.xlu0 %v288
    %v290 = vpop.xlane.xlu0 %289
    %v291 = vsel %vm275, %v222, 0.0
    %292 = vadd.xlane.f32.xlu0 %v291
    %v293 = vpop.xlane.xlu0 %292
    %v294 = vsel %vm275, %v227, 0.0
    %295 = vadd.xlane.f32.xlu0 %v294
    %v296 = vpop.xlane.xlu0 %295
    %v297 = vsel %vm275, %v232, 0.0
    %298 = vadd.xlane.f32.xlu0 %v297
    %v299 = vpop.xlane.xlu0 %298
    %v300 = vsel %vm275, %v237, 0.0
    %301 = vadd.xlane.f32.xlu0 %v300
    %v302 = vpop.xlane.xlu0 %301
    %v303 = vsel %vm275, %v242, 0.0
    %304 = vadd.xlane.f32.xlu0 %v303
    %v305 = vpop.xlane.xlu0 %304
    %v306 = vsel %vm275, %v247, 0.0
    %307 = vadd.xlane.f32.xlu0 %v306
    %v308 = vpop.xlane.xlu0 %307
    %v309 = vsel %vm275, %v252, 0.0
    %310 = vadd.xlane.f32.xlu0 %v309
    %v311 = vpop.xlane.xlu0 %310
    %v312 = vsel %vm275, %v257, 0.0
    %313 = vadd.xlane.f32.xlu0 %v312
    %v314 = vpop.xlane.xlu0 %313
    %v315 = vsel %vm275, %v262, 0.0
    %316 = vadd.xlane.f32.xlu0 %v315
    %v317 = vpop.xlane.xlu0 %316
    %v318 = vsel %vm275, %v267, 0.0
    %319 = vadd.xlane.f32.xlu0 %v318
    %v320 = vpop.xlane.xlu0 %319
    %v321 = vsel %vm275, %v272, 0.0
    %322 = vadd.xlane.f32.xlu0 %v321
    %v323 = vpop.xlane.xlu0 %322
    %v324 = vrcp.pop 32.0
    %v325 = vmul.f32 %v278, %v324
    %v326 = vmul.f32 %v281, %v324
    %v327 = vmul.f32 %v284, %v324
    %v328 = vmul.f32 %v287, %v324
    %v329 = vmul.f32 %v290, %v324
    %v330 = vmul.f32 %v293, %v324
    %v331 = vmul.f32 %v296, %v324
    %v332 = vmul.f32 %v299, %v324
    %v333 = vmul.f32 %v302, %v324
    %v334 = vmul.f32 %v305, %v324
    %v335 = vmul.f32 %v308, %v324
    %v336 = vmul.f32 %v311, %v324
    %v337 = vmul.f32 %v314, %v324
    %v338 = vmul.f32 %v317, %v324
    %v339 = vmul.f32 %v320, %v324
    %v340 = vmul.f32 %v323, %v324
    %v341 = vsub.f32 %v197, %v325
    %v342 = vsub.f32 %v202, %v326
    %v343 = vsub.f32 %v207, %v327
    %v344 = vsub.f32 %v212, %v328
    %v345 = vsub.f32 %v217, %v329
    %v346 = vsub.f32 %v222, %v330
    %v347 = vsub.f32 %v227, %v331
    %v348 = vsub.f32 %v232, %v332
    %v349 = vsub.f32 %v237, %v333
    %v350 = vsub.f32 %v242, %v334
    %v351 = vsub.f32 %v247, %v335
    %v352 = vsub.f32 %v252, %v336
    %v353 = vsub.f32 %v257, %v337
    %v354 = vsub.f32 %v262, %v338
    %v355 = vsub.f32 %v267, %v339
    %v356 = vsub.f32 %v272, %v340
    %v357 = vmul.f32 %v341, %v341
    %v358 = vmul.f32 %v342, %v342
    %v359 = vmul.f32 %v343, %v343
    %v360 = vmul.f32 %v344, %v344
    %v361 = vmul.f32 %v345, %v345
    %v362 = vmul.f32 %v346, %v346
    %v363 = vmul.f32 %v347, %v347
    %v364 = vmul.f32 %v348, %v348
    %v365 = vmul.f32 %v349, %v349
    %v366 = vmul.f32 %v350, %v350
    %v367 = vmul.f32 %v351, %v351
    %v368 = vmul.f32 %v352, %v352
    %v369 = vmul.f32 %v353, %v353
    %v370 = vmul.f32 %v354, %v354
    %v371 = vmul.f32 %v355, %v355
    %v372 = vmul.f32 %v356, %v356
    %v373 = vsel %vm275, %v357, 0.0
    %374 = vadd.xlane.f32.xlu0 %v373
    %v375 = vpop.xlane.xlu0 %374
    %v376 = vsel %vm275, %v358, 0.0
    %377 = vadd.xlane.f32.xlu0 %v376
    %v378 = vpop.xlane.xlu0 %377
    %v379 = vsel %vm275, %v359, 0.0
    %380 = vadd.xlane.f32.xlu0 %v379
    %v381 = vpop.xlane.xlu0 %380
    %v382 = vsel %vm275, %v360, 0.0
    %383 = vadd.xlane.f32.xlu0 %v382
    %v384 = vpop.xlane.xlu0 %383
    %v385 = vsel %vm275, %v361, 0.0
    %386 = vadd.xlane.f32.xlu0 %v385
    %v387 = vpop.xlane.xlu0 %386
    %v388 = vsel %vm275, %v362, 0.0
    %389 = vadd.xlane.f32.xlu0 %v388
    %v390 = vpop.xlane.xlu0 %389
    %v391 = vsel %vm275, %v363, 0.0
    %392 = vadd.xlane.f32.xlu0 %v391
    %v393 = vpop.xlane.xlu0 %392
    %v394 = vsel %vm275, %v364, 0.0
    %395 = vadd.xlane.f32.xlu0 %v394
    %v396 = vpop.xlane.xlu0 %395
    %v397 = vsel %vm275, %v365, 0.0
    %398 = vadd.xlane.f32.xlu0 %v397
    %v399 = vpop.xlane.xlu0 %398
    %v400 = vsel %vm275, %v366, 0.0
    %401 = vadd.xlane.f32.xlu0 %v400
    %v402 = vpop.xlane.xlu0 %401
    %v403 = vsel %vm275, %v367, 0.0
    %404 = vadd.xlane.f32.xlu0 %v403
    %v405 = vpop.xlane.xlu0 %404
    %v406 = vsel %vm275, %v368, 0.0
    %407 = vadd.xlane.f32.xlu0 %v406
    %v408 = vpop.xlane.xlu0 %407
    %v409 = vsel %vm275, %v369, 0.0
    %410 = vadd.xlane.f32.xlu0 %v409
    %v411 = vpop.xlane.xlu0 %410
    %v412 = vsel %vm275, %v370, 0.0
    %413 = vadd.xlane.f32.xlu0 %v412
    %v414 = vpop.xlane.xlu0 %413
    %v415 = vsel %vm275, %v371, 0.0
    %416 = vadd.xlane.f32.xlu0 %v415
    %v417 = vpop.xlane.xlu0 %416
    %v418 = vsel %vm275, %v372, 0.0
    %419 = vadd.xlane.f32.xlu0 %v418
    %v420 = vpop.xlane.xlu0 %419
    %v421 = vmul.f32 %v375, %v324
    %v422 = vmul.f32 %v378, %v324
    %v423 = vmul.f32 %v381, %v324
    %v424 = vmul.f32 %v384, %v324
    %v425 = vmul.f32 %v387, %v324
    %v426 = vmul.f32 %v390, %v324
    %v427 = vmul.f32 %v393, %v324
    %v428 = vmul.f32 %v396, %v324
    %v429 = vmul.f32 %v399, %v324
    %v430 = vmul.f32 %v402, %v324
    %v431 = vmul.f32 %v405, %v324
    %v432 = vmul.f32 %v408, %v324
    %v433 = vmul.f32 %v411, %v324
    %v434 = vmul.f32 %v414, %v324
    %v435 = vmul.f32 %v417, %v324
    %v436 = vmul.f32 %v420, %v324
    %v437 = vadd.f32 %v421, 1e-05
    %v438 = vadd.f32 %v422, 1e-05
    %v439 = vadd.f32 %v423, 1e-05
    %v440 = vadd.f32 %v424, 1e-05
    %v441 = vadd.f32 %v425, 1e-05
    %v442 = vadd.f32 %v426, 1e-05
    %v443 = vadd.f32 %v427, 1e-05
    %v444 = vadd.f32 %v428, 1e-05
    %v445 = vadd.f32 %v429, 1e-05
    %v446 = vadd.f32 %v430, 1e-05
    %v447 = vadd.f32 %v431, 1e-05
    %v448 = vadd.f32 %v432, 1e-05
    %v449 = vadd.f32 %v433, 1e-05
    %v450 = vadd.f32 %v434, 1e-05
    %v451 = vadd.f32 %v435, 1e-05
    %v452 = vadd.f32 %v436, 1e-05
    %v453 = vrsqrt.pop %v437
    %v454 = vrsqrt.pop %v438
    %v455 = vrsqrt.pop %v439
    %v456 = vrsqrt.pop %v440
    %v457 = vrsqrt.pop %v441
    %v458 = vrsqrt.pop %v442
    %v459 = vrsqrt.pop %v443
    %v460 = vrsqrt.pop %v444
    %v461 = vrsqrt.pop %v445
    %v462 = vrsqrt.pop %v446
    %v463 = vrsqrt.pop %v447
    %v464 = vrsqrt.pop %v448
    %v465 = vrsqrt.pop %v449
    %v466 = vrsqrt.pop %v450
    %v467 = vrsqrt.pop %v451
    %v468 = vrsqrt.pop %v452
    %v469 = vmul.f32 %v341, %v453
    %v470 = vmul.f32 %v342, %v454
    %v471 = vmul.f32 %v343, %v455
    %v472 = vmul.f32 %v344, %v456
    %v473 = vmul.f32 %v345, %v457
    %v474 = vmul.f32 %v346, %v458
    %v475 = vmul.f32 %v347, %v459
    %v476 = vmul.f32 %v348, %v460
    %v477 = vmul.f32 %v349, %v461
    %v478 = vmul.f32 %v350, %v462
    %v479 = vmul.f32 %v351, %v463
    %v480 = vmul.f32 %v352, %v464
    %v481 = vmul.f32 %v353, %v465
    %v482 = vmul.f32 %v354, %v466
    %v483 = vmul.f32 %v355, %v467
    %v484 = vmul.f32 %v356, %v468
    %v485 = vlaneseq
    %v486 = vshrl.u32 %v485, 7
    %v487 = vsub.s32 1, %v486
    %v488 = vrot.slane %v72, %v487
    %v489 = vmul.f32 %v469, %v488
    %v490 = vmul.f32 %v470, %v488
    %v491 = vmul.f32 %v471, %v488
    %v492 = vmul.f32 %v472, %v488
    %v493 = vmul.f32 %v473, %v488
    %v494 = vmul.f32 %v474, %v488
    %v495 = vmul.f32 %v475, %v488
    %v496 = vmul.f32 %v476, %v488
    %v497 = vmul.f32 %v477, %v488
    %v498 = vmul.f32 %v478, %v488
    %v499 = vmul.f32 %v479, %v488
    %v500 = vmul.f32 %v480, %v488
    %v501 = vmul.f32 %v481, %v488
    %v502 = vmul.f32 %v482, %v488
    %v503 = vmul.f32 %v483, %v488
    %v504 = vmul.f32 %v484, %v488
    %v505 = vlaneseq
    %v506 = vshrl.u32 %v505, 7
    %v507 = vsub.s32 2, %v506
    %v508 = vrot.slane %v72, %v507
    %v509 = vadd.f32 %v489, %v508
    %v510 = vadd.f32 %v490, %v508
    %v511 = vadd.f32 %v491, %v508
    %v512 = vadd.f32 %v492, %v508
    %v513 = vadd.f32 %v493, %v508
    %v514 = vadd.f32 %v494, %v508
    %v515 = vadd.f32 %v495, %v508
    %v516 = vadd.f32 %v496, %v508
    %v517 = vadd.f32 %v497, %v508
    %v518 = vadd.f32 %v498, %v508
    %v519 = vadd.f32 %v499, %v508
    %v520 = vadd.f32 %v500, %v508
    %v521 = vadd.f32 %v501, %v508
    %v522 = vadd.f32 %v502, %v508
    %v523 = vadd.f32 %v503, %v508
    %v524 = vadd.f32 %v504, %v508
    %525 = vst.msk [vmem:[#allocation2] sm:$0xff] %vm275, %v509
    %526 = vst.msk [vmem:[#allocation2 + $0x8] sm:$0xff] %vm275, %v510
    %527 = vst.msk [vmem:[#allocation2 + $0x10] sm:$0xff] %vm275, %v511
    %528 = vst.msk [vmem:[#allocation2 + $0x18] sm:$0xff] %vm275, %v512
    %529 = vst.msk [vmem:[#allocation2 + $0x20] sm:$0xff] %vm275, %v513
    %530 = vst.msk [vmem:[#allocation2 + $0x28] sm:$0xff] %vm275, %v514
    %531 = vst.msk [vmem:[#allocation2 + $0x30] sm:$0xff] %vm275, %v515
    %532 = vst.msk [vmem:[#allocation2 + $0x38] sm:$0xff] %vm275, %v516
    %533 = vst.msk [vmem:[#allocation2 + $0x40] sm:$0xff] %vm275, %v517
    %534 = vst.msk [vmem:[#allocation2 + $0x48] sm:$0xff] %vm275, %v518
    %535 = vst.msk [vmem:[#allocation2 + $0x50] sm:$0xff] %vm275, %v519
    %536 = vst.msk [vmem:[#allocation2 + $0x58] sm:$0xff] %vm275, %v520
    %537 = vst.msk [vmem:[#allocation2 + $0x60] sm:$0xff] %vm275, %v521
    %538 = vst.msk [vmem:[#allocation2 + $0x68] sm:$0xff] %vm275, %v522
    %539 = vst.msk [vmem:[#allocation2 + $0x70] sm:$0xff] %vm275, %v523
    %540 = vst.msk [vmem:[#allocation2 + $0x78] sm:$0xff] %vm275, %v524
    // Predicated region
    $region14: #{tpu_custom_call.1} parent=1 // pred_check
      _
    $region15: #{tpu_custom_call.1} parent=1 // pred_check_branch
      %542 = sbr.rel (0) target = $region17
    $region16: #{tpu_custom_call.1} parent=1 // pred_region
      %s544 = ssub.s32 2048, 512
      %545 = vsyncadd [#allocation3], %s544
      %s546 = sshll.u32 [#allocation2], 4
      %s547 = int_to_ptr.vmem [resolvable:$true] %s546
      %552 = dma.vmem_to_hbm [thread:$0]  %s547, 512, %s3, [#allocation3], 128, 128, 8
    $region17: #{tpu_custom_call.1} parent=1 // pred_fallthru
      _
    // Predicated region
    $region18: #{tpu_custom_call.1} parent=1 // pred_check
      _
    $region19: #{tpu_custom_call.1} parent=1 // pred_check_branch
      %554 = sbr.rel (0) target = $region21
    $region20: #{tpu_custom_call.1} parent=1 // pred_region
      %555 = dma.done [#allocation3], 2048
    $region21: #{tpu_custom_call.1} parent=1 // pred_fallthru
      _
    %556 = vsyncpa [#allocation3], 1

// kernel: tpu_custom_call.1
$region0: #{tpu_custom_call.1}
  #allocation0 [shape = 'u32[]', space=smem, size = 0x4, offset = 0x4, fixed_abs, tag = 'smem constant byte address 0x4 - core index']
  #allocation1 [shape = 'u32[144,128]{1,0:T(1,128)}', space=vmem, size = 0x12000, scoped, tag = 'internal scratch']
  %s0 = inlined_call_operand.vmem [shape: f32[32,196], index: 0, kind: input, shape index: {}]
  %s1 = inlined_call_operand.vmem [shape: f32[196,32], index: 1, kind: input, shape index: {}]
  %s2 = inlined_call_operand.vmem [shape: f32[3,32], index: 2, kind: input, shape index: {}]
  %s3 = inlined_call_operand.hbm [shape: f32[32,32], index: 3, kind: output, shape index: {}]
  %s4 = sld [smem:[#allocation0]]
  $region22: #{tpu_custom_call.1} parent=0
    _
  %s6 = ssub.s32 1, %s4
  %s7 = scalar_select 0, %s6, %s4
  $region1: #{tpu_custom_call.1} parent=0
    #allocation2 [shape = 'u8[65536]{0}', space=vmem, size = 0x10000, scoped, tag = 'output window, operand 0, single buffered']
    #allocation3 [shape = 's32[1]{0}', space=sflag, size = 0x4, scoped, tag = 'scoped memory for tpu_custom_call.1']
    %8 = vsyncpa [#allocation3], 0
    // Predicated region
    $region2: #{tpu_custom_call.1} parent=1 // pred_check
      _
    $region3: #{tpu_custom_call.1} parent=1 // pred_check_branch
      %10 = sbr.rel (0) target = $region5
    $region4: #{tpu_custom_call.1} parent=1 // pred_region
      _
    $region5: #{tpu_custom_call.1} parent=1 // pred_fallthru
      _
    // Predicated region
    $region6: #{tpu_custom_call.1} parent=1 // pred_check
      _
    $region7: #{tpu_custom_call.1} parent=1 // pred_check_branch
      %12 = sbr.rel (0) target = $region9
    $region8: #{tpu_custom_call.1} parent=1 // pred_region
      _
    $region9: #{tpu_custom_call.1} parent=1 // pred_fallthru
      _
    // Predicated region
    $region10: #{tpu_custom_call.1} parent=1 // pred_check
      _
    $region11: #{tpu_custom_call.1} parent=1 // pred_check_branch
      %14 = sbr.rel (0) target = $region13
    $region12: #{tpu_custom_call.1} parent=1 // pred_region
      _
    $region13: #{tpu_custom_call.1} parent=1 // pred_fallthru
      _
    %v15 = vld [vmem:[%s0] sm:$0xff]
    %v16 = vld [vmem:[%s0 + $0x8] sm:$0xff]
    %v17 = vld [vmem:[%s0 + $0x10] sm:$0xff]
    %v18 = vld [vmem:[%s0 + $0x18] sm:$0xff]
    %v19 = vld [vmem:[%s0 + $0x20] sm:$0xff]
    %v20 = vld [vmem:[%s0 + $0x28] sm:$0xff]
    %v21 = vld [vmem:[%s0 + $0x30] sm:$0xff]
    %v22 = vld [vmem:[%s0 + $0x38] sm:$0xff]
    %v23 = vld [vmem:[%s0 + $0x40] sm:$0xff]
    %v24 = vld [vmem:[%s0 + $0x48] sm:$0xff]
    %v25 = vld [vmem:[%s0 + $0x50] sm:$0xff]
    %v26 = vld [vmem:[%s0 + $0x58] sm:$0xff]
    %v27 = vld [vmem:[%s0 + $0x60] sm:$0xff]
    %v28 = vld [vmem:[%s0 + $0x68] sm:$0xff]
    %v29 = vld [vmem:[%s0 + $0x70] sm:$0xff]
    %v30 = vld [vmem:[%s0 + $0x78] sm:$0xff]
    %v31 = vld [vmem:[%s0 + $0x80] sm:$0xff]
    %v32 = vld [vmem:[%s0 + $0x88] sm:$0xff]
    %v33 = vld [vmem:[%s0 + $0x90] sm:$0xff]
    %v34 = vld [vmem:[%s0 + $0x98] sm:$0xff]
    %v35 = vld [vmem:[%s0 + $0xa0] sm:$0xff]
    %v36 = vld [vmem:[%s0 + $0xa8] sm:$0xff]
    %v37 = vld [vmem:[%s0 + $0xb0] sm:$0xff]
    %v38 = vld [vmem:[%s0 + $0xb8] sm:$0xff]
    %v39 = vld [vmem:[%s0 + $0xc0] sm:$0xff]
    %v40 = vld [vmem:[%s0 + $0xc8] sm:$0xff]
    %v41 = vld [vmem:[%s0 + $0xd0] sm:$0xff]
    %v42 = vld [vmem:[%s0 + $0xd8] sm:$0xff]
    %v43 = vld [vmem:[%s0 + $0xe0] sm:$0xff]
    %v44 = vld [vmem:[%s0 + $0xe8] sm:$0xff]
    %v45 = vld [vmem:[%s0 + $0xf0] sm:$0xff]
    %v46 = vld [vmem:[%s0 + $0xf8] sm:$0xff]
    %v47 = vld [vmem:[%s1] sm:$0xff]
    %v48 = vld [vmem:[%s1 + $0x8] sm:$0xff]
    %v49 = vld [vmem:[%s1 + $0x10] sm:$0xff]
    %v50 = vld [vmem:[%s1 + $0x18] sm:$0xff]
    %v51 = vld [vmem:[%s1 + $0x20] sm:$0xff]
    %v52 = vld [vmem:[%s1 + $0x28] sm:$0xff]
    %v53 = vld [vmem:[%s1 + $0x30] sm:$0xff]
    %v54 = vld [vmem:[%s1 + $0x38] sm:$0xff]
    %v55 = vld [vmem:[%s1 + $0x40] sm:$0xff]
    %v56 = vld [vmem:[%s1 + $0x48] sm:$0xff]
    %v57 = vld [vmem:[%s1 + $0x50] sm:$0xff]
    %v58 = vld [vmem:[%s1 + $0x58] sm:$0xff]
    %v59 = vld [vmem:[%s1 + $0x60] sm:$0xff]
    %v60 = vld [vmem:[%s1 + $0x68] sm:$0xff]
    %v61 = vld [vmem:[%s1 + $0x70] sm:$0xff]
    %v62 = vld [vmem:[%s1 + $0x78] sm:$0xff]
    %v63 = vld [vmem:[%s1 + $0x80] sm:$0xff]
    %v64 = vld [vmem:[%s1 + $0x88] sm:$0xff]
    %v65 = vld [vmem:[%s1 + $0x90] sm:$0xff]
    %v66 = vld [vmem:[%s1 + $0x98] sm:$0xff]
    %v67 = vld [vmem:[%s1 + $0xa0] sm:$0xff]
    %v68 = vld [vmem:[%s1 + $0xa8] sm:$0xff]
    %v69 = vld [vmem:[%s1 + $0xb0] sm:$0xff]
    %v70 = vld [vmem:[%s1 + $0xb8] sm:$0xff]
    %v71 = vld [vmem:[%s1 + $0xc0] sm:$0xf]
    %v72 = vld [vmem:[%s2] sm:$0x7]
    %v73 = vlaneseq
    %v74 = vshrl.u32 %v73, 7
    %v75 = vsub.s32 0, %v74
    %v76 = vrot.slane %v72, %v75
    %vm77 = vcmask 556032
    %v79 = vsel %vm77, %v16, 0
    %v82 = vsel %vm77, %v18, 0
    %v85 = vsel %vm77, %v20, 0
    %v88 = vsel %vm77, %v22, 0
    %v91 = vsel %vm77, %v24, 0
    %v94 = vsel %vm77, %v26, 0
    %v97 = vsel %vm77, %v28, 0
    %v100 = vsel %vm77, %v30, 0
    %v103 = vsel %vm77, %v32, 0
    %v106 = vsel %vm77, %v34, 0
    %v109 = vsel %vm77, %v36, 0
    %v112 = vsel %vm77, %v38, 0
    %v115 = vsel %vm77, %v40, 0
    %v118 = vsel %vm77, %v42, 0
    %v121 = vsel %vm77, %v44, 0
    %v124 = vsel %vm77, %v46, 0
    %vm126 = vcmask 1043456
    %v128 = vsel %vm126, %v71, 0
    %130 = vmatprep.subr.mxu0 0.0
    %131 = vmatpush1.msra.mxu0 %v47
    %132 = vmatprep.subr.mxu0 0.0
    %133 = vmatpush1.msra.mxu0 %v48
    %134 = vmatprep.subr.mxu0 0.0
    %135 = vmatpush1.msra.mxu0 %v49
    %136 = vmatprep.subr.mxu0 0.0
    %137 = vmatpush1.msra.mxu0 %v50
    %138 = vmatprep.subr.mxu0 0.0
    %139 = vmatpush1.msra.mxu0 %v51
    %140 = vmatprep.subr.mxu0 0.0
    %141 = vmatpush1.msra.mxu0 %v52
    %142 = vmatprep.subr.mxu0 0.0
    %143 = vmatpush1.msra.mxu0 %v53
    %144 = vmatprep.subr.mxu0 0.0
    %145 = vmatpush1.msra.mxu0 %v54
    %146 = vmatprep.subr.mxu0 0.0
    %147 = vmatpush1.msra.mxu0 %v55
    %148 = vmatprep.subr.mxu0 0.0
    %149 = vmatpush1.msra.mxu0 %v56
    %150 = vmatprep.subr.mxu0 0.0
    %151 = vmatpush1.msra.mxu0 %v57
    %152 = vmatprep.subr.mxu0 0.0
    %153 = vmatpush1.msra.mxu0 %v58
    %154 = vmatprep.subr.mxu0 0.0
    %155 = vmatpush1.msra.mxu0 %v59
    %156 = vmatprep.subr.mxu0 0.0
    %157 = vmatpush1.msra.mxu0 %v60
    %158 = vmatprep.subr.mxu0 0.0
    %159 = vmatpush1.msra.mxu0 %v61
    %160 = vmatprep.subr.mxu0 0.0
    %161 = vmatpush1.msra.mxu0 %v62
    %162 = vmatprep.subr.mxu0 0.0
    %163 = vmatpush1.msra.mxu0 %v63
    %164 = vmatprep.subr.mxu0 0.0
    %165 = vmatpush1.msra.mxu0 %v64
    %166 = vmatprep.subr.mxu0 0.0
    %167 = vmatpush1.msra.mxu0 %v65
    %168 = vmatprep.subr.mxu0 0.0
    %169 = vmatpush1.msra.mxu0 %v66
    %170 = vmatprep.subr.mxu0 0.0
    %171 = vmatpush1.msra.mxu0 %v67
    %172 = vmatprep.subr.mxu0 0.0
    %173 = vmatpush1.msra.mxu0 %v68
    %174 = vmatprep.subr.mxu0 0.0
    %175 = vmatpush1.msra.mxu0 %v69
    %176 = vmatprep.subr.mxu0 0.0
    %177 = vmatpush1.msra.mxu0 %v70
    %178 = vmatprep.subr.mxu0 0.0
    %179 = vmatpush1.msra.mxu0 %v128
    %180 = vmatprep.subr.mxu0 0.0
    %181 = vmatpush1.msra.mxu0 0.0
    %182 = vmatprep.subr.mxu0 0.0
    %183 = vmatpush1.msra.mxu0 0.0
    %184 = vmatprep.subr.mxu0 0.0
    %185 = vmatpush1.msra.mxu0 0.0
    %186 = vmatprep.subr.mxu0 0.0
    %187 = vmatpush1.msra.mxu0 0.0
    %188 = vmatprep.subr.mxu0 0.0
    %189 = vmatpush1.msra.mxu0 0.0
    %190 = vmatprep.subr.mxu0 0.0
    %191 = vmatpush1.msra.mxu0 0.0
    %192 = vmatprep.subr.mxu0 0.0
    %193 = vmatpush1.msra.mxu0 0.0
    %194 = vmatprep.mubr.f32.mxu0 %v79
    %195 = vmatmul.mubr.f32.gmra.mrb[0].mxu0 %v15
    %v196 = vpop.f32.mrb[0].mxu0
    %v197 = vadd.f32 %v76, %v196
    %v198 = vpop.f32.mrb[0].mxu0
    %199 = vmatprep.mubr.f32.mxu0 %v82
    %200 = vmatmul.mubr.f32.gmra.mrb[0].mxu0 %v17
    %v201 = vpop.f32.mrb[0].mxu0
    %v202 = vadd.f32 %v76, %v201
    %v203 = vpop.f32.mrb[0].mxu0
    %204 = vmatprep.mubr.f32.mxu0 %v85
    %205 = vmatmul.mubr.f32.gmra.mrb[0].mxu0 %v19
    %v206 = vpop.f32.mrb[0].mxu0
    %v207 = vadd.f32 %v76, %v206
    %v208 = vpop.f32.mrb[0].mxu0
    %209 = vmatprep.mubr.f32.mxu0 %v88
    %210 = vmatmul.mubr.f32.gmra.mrb[0].mxu0 %v21
    %v211 = vpop.f32.mrb[0].mxu0
    %v212 = vadd.f32 %v76, %v211
    %v213 = vpop.f32.mrb[0].mxu0
    %214 = vmatprep.mubr.f32.mxu0 %v91
    %215 = vmatmul.mubr.f32.gmra.mrb[0].mxu0 %v23
    %v216 = vpop.f32.mrb[0].mxu0
    %v217 = vadd.f32 %v76, %v216
    %v218 = vpop.f32.mrb[0].mxu0
    %219 = vmatprep.mubr.f32.mxu0 %v94
    %220 = vmatmul.mubr.f32.gmra.mrb[0].mxu0 %v25
    %v221 = vpop.f32.mrb[0].mxu0
    %v222 = vadd.f32 %v76, %v221
    %v223 = vpop.f32.mrb[0].mxu0
    %224 = vmatprep.mubr.f32.mxu0 %v97
    %225 = vmatmul.mubr.f32.gmra.mrb[0].mxu0 %v27
    %v226 = vpop.f32.mrb[0].mxu0
    %v227 = vadd.f32 %v76, %v226
    %v228 = vpop.f32.mrb[0].mxu0
    %229 = vmatprep.mubr.f32.mxu0 %v100
    %230 = vmatmul.mubr.f32.gmra.mrb[0].mxu0 %v29
    %v231 = vpop.f32.mrb[0].mxu0
    %v232 = vadd.f32 %v76, %v231
    %v233 = vpop.f32.mrb[0].mxu0
    %234 = vmatprep.mubr.f32.mxu0 %v103
    %235 = vmatmul.mubr.f32.gmra.mrb[0].mxu0 %v31
    %v236 = vpop.f32.mrb[0].mxu0
    %v237 = vadd.f32 %v76, %v236
    %v238 = vpop.f32.mrb[0].mxu0
    %239 = vmatprep.mubr.f32.mxu0 %v106
    %240 = vmatmul.mubr.f32.gmra.mrb[0].mxu0 %v33
    %v241 = vpop.f32.mrb[0].mxu0
    %v242 = vadd.f32 %v76, %v241
    %v243 = vpop.f32.mrb[0].mxu0
    %244 = vmatprep.mubr.f32.mxu0 %v109
    %245 = vmatmul.mubr.f32.gmra.mrb[0].mxu0 %v35
    %v246 = vpop.f32.mrb[0].mxu0
    %v247 = vadd.f32 %v76, %v246
    %v248 = vpop.f32.mrb[0].mxu0
    %249 = vmatprep.mubr.f32.mxu0 %v112
    %250 = vmatmul.mubr.f32.gmra.mrb[0].mxu0 %v37
    %v251 = vpop.f32.mrb[0].mxu0
    %v252 = vadd.f32 %v76, %v251
    %v253 = vpop.f32.mrb[0].mxu0
    %254 = vmatprep.mubr.f32.mxu0 %v115
    %255 = vmatmul.mubr.f32.gmra.mrb[0].mxu0 %v39
    %v256 = vpop.f32.mrb[0].mxu0
    %v257 = vadd.f32 %v76, %v256
    %v258 = vpop.f32.mrb[0].mxu0
    %259 = vmatprep.mubr.f32.mxu0 %v118
    %260 = vmatmul.mubr.f32.gmra.mrb[0].mxu0 %v41
    %v261 = vpop.f32.mrb[0].mxu0
    %v262 = vadd.f32 %v76, %v261
    %v263 = vpop.f32.mrb[0].mxu0
    %264 = vmatprep.mubr.f32.mxu0 %v121
    %265 = vmatmul.mubr.f32.gmra.mrb[0].mxu0 %v43
    %v266 = vpop.f32.mrb[0].mxu0
    %v267 = vadd.f32 %v76, %v266
    %v268 = vpop.f32.mrb[0].mxu0
    %269 = vmatprep.mubr.f32.mxu0 %v124
    %270 = vmatmul.mubr.f32.gmra.mrb[0].mxu0 %v45
    %v271 = vpop.f32.mrb[0].mxu0
    %v272 = vadd.f32 %v76, %v271
    %v273 = vpop.f32.mrb[0].mxu0
    %274 = vdwg.mxu0
    %vm275 = vcmask 261120
    %v276 = vsel %vm275, %v197, 0.0
    %277 = vadd.xlane.f32.xlu0 %v276
    %v278 = vpop.xlane.xlu0 %277
    %v279 = vsel %vm275, %v202, 0.0
    %280 = vadd.xlane.f32.xlu0 %v279
    %v281 = vpop.xlane.xlu0 %280
    %v282 = vsel %vm275, %v207, 0.0
    %283 = vadd.xlane.f32.xlu0 %v282
    %v284 = vpop.xlane.xlu0 %283
    %v285 = vsel %vm275, %v212, 0.0
    %286 = vadd.xlane.f32.xlu0 %v285
    %v287 = vpop.xlane.xlu0 %286
    %v288 = vsel %vm275, %v217, 0.0
    %289 = vadd.xlane.f32.xlu0 %v288
    %v290 = vpop.xlane.xlu0 %289
    %v291 = vsel %vm275, %v222, 0.0
    %292 = vadd.xlane.f32.xlu0 %v291
    %v293 = vpop.xlane.xlu0 %292
    %v294 = vsel %vm275, %v227, 0.0
    %295 = vadd.xlane.f32.xlu0 %v294
    %v296 = vpop.xlane.xlu0 %295
    %v297 = vsel %vm275, %v232, 0.0
    %298 = vadd.xlane.f32.xlu0 %v297
    %v299 = vpop.xlane.xlu0 %298
    %v300 = vsel %vm275, %v237, 0.0
    %301 = vadd.xlane.f32.xlu0 %v300
    %v302 = vpop.xlane.xlu0 %301
    %v303 = vsel %vm275, %v242, 0.0
    %304 = vadd.xlane.f32.xlu0 %v303
    %v305 = vpop.xlane.xlu0 %304
    %v306 = vsel %vm275, %v247, 0.0
    %307 = vadd.xlane.f32.xlu0 %v306
    %v308 = vpop.xlane.xlu0 %307
    %v309 = vsel %vm275, %v252, 0.0
    %310 = vadd.xlane.f32.xlu0 %v309
    %v311 = vpop.xlane.xlu0 %310
    %v312 = vsel %vm275, %v257, 0.0
    %313 = vadd.xlane.f32.xlu0 %v312
    %v314 = vpop.xlane.xlu0 %313
    %v315 = vsel %vm275, %v262, 0.0
    %316 = vadd.xlane.f32.xlu0 %v315
    %v317 = vpop.xlane.xlu0 %316
    %v318 = vsel %vm275, %v267, 0.0
    %319 = vadd.xlane.f32.xlu0 %v318
    %v320 = vpop.xlane.xlu0 %319
    %v321 = vsel %vm275, %v272, 0.0
    %322 = vadd.xlane.f32.xlu0 %v321
    %v323 = vpop.xlane.xlu0 %322
    %v324 = vrcp.pop 32.0
    %v325 = vmul.f32 %v278, %v324
    %v326 = vmul.f32 %v281, %v324
    %v327 = vmul.f32 %v284, %v324
    %v328 = vmul.f32 %v287, %v324
    %v329 = vmul.f32 %v290, %v324
    %v330 = vmul.f32 %v293, %v324
    %v331 = vmul.f32 %v296, %v324
    %v332 = vmul.f32 %v299, %v324
    %v333 = vmul.f32 %v302, %v324
    %v334 = vmul.f32 %v305, %v324
    %v335 = vmul.f32 %v308, %v324
    %v336 = vmul.f32 %v311, %v324
    %v337 = vmul.f32 %v314, %v324
    %v338 = vmul.f32 %v317, %v324
    %v339 = vmul.f32 %v320, %v324
    %v340 = vmul.f32 %v323, %v324
    %v341 = vsub.f32 %v197, %v325
    %v342 = vsub.f32 %v202, %v326
    %v343 = vsub.f32 %v207, %v327
    %v344 = vsub.f32 %v212, %v328
    %v345 = vsub.f32 %v217, %v329
    %v346 = vsub.f32 %v222, %v330
    %v347 = vsub.f32 %v227, %v331
    %v348 = vsub.f32 %v232, %v332
    %v349 = vsub.f32 %v237, %v333
    %v350 = vsub.f32 %v242, %v334
    %v351 = vsub.f32 %v247, %v335
    %v352 = vsub.f32 %v252, %v336
    %v353 = vsub.f32 %v257, %v337
    %v354 = vsub.f32 %v262, %v338
    %v355 = vsub.f32 %v267, %v339
    %v356 = vsub.f32 %v272, %v340
    %v357 = vmul.f32 %v341, %v341
    %v358 = vmul.f32 %v342, %v342
    %v359 = vmul.f32 %v343, %v343
    %v360 = vmul.f32 %v344, %v344
    %v361 = vmul.f32 %v345, %v345
    %v362 = vmul.f32 %v346, %v346
    %v363 = vmul.f32 %v347, %v347
    %v364 = vmul.f32 %v348, %v348
    %v365 = vmul.f32 %v349, %v349
    %v366 = vmul.f32 %v350, %v350
    %v367 = vmul.f32 %v351, %v351
    %v368 = vmul.f32 %v352, %v352
    %v369 = vmul.f32 %v353, %v353
    %v370 = vmul.f32 %v354, %v354
    %v371 = vmul.f32 %v355, %v355
    %v372 = vmul.f32 %v356, %v356
    %v373 = vsel %vm275, %v357, 0.0
    %374 = vadd.xlane.f32.xlu0 %v373
    %v375 = vpop.xlane.xlu0 %374
    %v376 = vsel %vm275, %v358, 0.0
    %377 = vadd.xlane.f32.xlu0 %v376
    %v378 = vpop.xlane.xlu0 %377
    %v379 = vsel %vm275, %v359, 0.0
    %380 = vadd.xlane.f32.xlu0 %v379
    %v381 = vpop.xlane.xlu0 %380
    %v382 = vsel %vm275, %v360, 0.0
    %383 = vadd.xlane.f32.xlu0 %v382
    %v384 = vpop.xlane.xlu0 %383
    %v385 = vsel %vm275, %v361, 0.0
    %386 = vadd.xlane.f32.xlu0 %v385
    %v387 = vpop.xlane.xlu0 %386
    %v388 = vsel %vm275, %v362, 0.0
    %389 = vadd.xlane.f32.xlu0 %v388
    %v390 = vpop.xlane.xlu0 %389
    %v391 = vsel %vm275, %v363, 0.0
    %392 = vadd.xlane.f32.xlu0 %v391
    %v393 = vpop.xlane.xlu0 %392
    %v394 = vsel %vm275, %v364, 0.0
    %395 = vadd.xlane.f32.xlu0 %v394
    %v396 = vpop.xlane.xlu0 %395
    %v397 = vsel %vm275, %v365, 0.0
    %398 = vadd.xlane.f32.xlu0 %v397
    %v399 = vpop.xlane.xlu0 %398
    %v400 = vsel %vm275, %v366, 0.0
    %401 = vadd.xlane.f32.xlu0 %v400
    %v402 = vpop.xlane.xlu0 %401
    %v403 = vsel %vm275, %v367, 0.0
    %404 = vadd.xlane.f32.xlu0 %v403
    %v405 = vpop.xlane.xlu0 %404
    %v406 = vsel %vm275, %v368, 0.0
    %407 = vadd.xlane.f32.xlu0 %v406
    %v408 = vpop.xlane.xlu0 %407
    %v409 = vsel %vm275, %v369, 0.0
    %410 = vadd.xlane.f32.xlu0 %v409
    %v411 = vpop.xlane.xlu0 %410
    %v412 = vsel %vm275, %v370, 0.0
    %413 = vadd.xlane.f32.xlu0 %v412
    %v414 = vpop.xlane.xlu0 %413
    %v415 = vsel %vm275, %v371, 0.0
    %416 = vadd.xlane.f32.xlu0 %v415
    %v417 = vpop.xlane.xlu0 %416
    %v418 = vsel %vm275, %v372, 0.0
    %419 = vadd.xlane.f32.xlu0 %v418
    %v420 = vpop.xlane.xlu0 %419
    %v421 = vmul.f32 %v375, %v324
    %v422 = vmul.f32 %v378, %v324
    %v423 = vmul.f32 %v381, %v324
    %v424 = vmul.f32 %v384, %v324
    %v425 = vmul.f32 %v387, %v324
    %v426 = vmul.f32 %v390, %v324
    %v427 = vmul.f32 %v393, %v324
    %v428 = vmul.f32 %v396, %v324
    %v429 = vmul.f32 %v399, %v324
    %v430 = vmul.f32 %v402, %v324
    %v431 = vmul.f32 %v405, %v324
    %v432 = vmul.f32 %v408, %v324
    %v433 = vmul.f32 %v411, %v324
    %v434 = vmul.f32 %v414, %v324
    %v435 = vmul.f32 %v417, %v324
    %v436 = vmul.f32 %v420, %v324
    %v437 = vadd.f32 %v421, 1e-05
    %v438 = vadd.f32 %v422, 1e-05
    %v439 = vadd.f32 %v423, 1e-05
    %v440 = vadd.f32 %v424, 1e-05
    %v441 = vadd.f32 %v425, 1e-05
    %v442 = vadd.f32 %v426, 1e-05
    %v443 = vadd.f32 %v427, 1e-05
    %v444 = vadd.f32 %v428, 1e-05
    %v445 = vadd.f32 %v429, 1e-05
    %v446 = vadd.f32 %v430, 1e-05
    %v447 = vadd.f32 %v431, 1e-05
    %v448 = vadd.f32 %v432, 1e-05
    %v449 = vadd.f32 %v433, 1e-05
    %v450 = vadd.f32 %v434, 1e-05
    %v451 = vadd.f32 %v435, 1e-05
    %v452 = vadd.f32 %v436, 1e-05
    %v453 = vrsqrt.pop %v437
    %v454 = vrsqrt.pop %v438
    %v455 = vrsqrt.pop %v439
    %v456 = vrsqrt.pop %v440
    %v457 = vrsqrt.pop %v441
    %v458 = vrsqrt.pop %v442
    %v459 = vrsqrt.pop %v443
    %v460 = vrsqrt.pop %v444
    %v461 = vrsqrt.pop %v445
    %v462 = vrsqrt.pop %v446
    %v463 = vrsqrt.pop %v447
    %v464 = vrsqrt.pop %v448
    %v465 = vrsqrt.pop %v449
    %v466 = vrsqrt.pop %v450
    %v467 = vrsqrt.pop %v451
    %v468 = vrsqrt.pop %v452
    %v469 = vmul.f32 %v341, %v453
    %v470 = vmul.f32 %v342, %v454
    %v471 = vmul.f32 %v343, %v455
    %v472 = vmul.f32 %v344, %v456
    %v473 = vmul.f32 %v345, %v457
    %v474 = vmul.f32 %v346, %v458
    %v475 = vmul.f32 %v347, %v459
    %v476 = vmul.f32 %v348, %v460
    %v477 = vmul.f32 %v349, %v461
    %v478 = vmul.f32 %v350, %v462
    %v479 = vmul.f32 %v351, %v463
    %v480 = vmul.f32 %v352, %v464
    %v481 = vmul.f32 %v353, %v465
    %v482 = vmul.f32 %v354, %v466
    %v483 = vmul.f32 %v355, %v467
    %v484 = vmul.f32 %v356, %v468
    %v485 = vlaneseq
    %v486 = vshrl.u32 %v485, 7
    %v487 = vsub.s32 1, %v486
    %v488 = vrot.slane %v72, %v487
    %v489 = vmul.f32 %v469, %v488
    %v490 = vmul.f32 %v470, %v488
    %v491 = vmul.f32 %v471, %v488
    %v492 = vmul.f32 %v472, %v488
    %v493 = vmul.f32 %v473, %v488
    %v494 = vmul.f32 %v474, %v488
    %v495 = vmul.f32 %v475, %v488
    %v496 = vmul.f32 %v476, %v488
    %v497 = vmul.f32 %v477, %v488
    %v498 = vmul.f32 %v478, %v488
    %v499 = vmul.f32 %v479, %v488
    %v500 = vmul.f32 %v480, %v488
    %v501 = vmul.f32 %v481, %v488
    %v502 = vmul.f32 %v482, %v488
    %v503 = vmul.f32 %v483, %v488
    %v504 = vmul.f32 %v484, %v488
    %v505 = vlaneseq
    %v506 = vshrl.u32 %v505, 7
    %v507 = vsub.s32 2, %v506
    %v508 = vrot.slane %v72, %v507
    %v509 = vadd.f32 %v489, %v508
    %v510 = vadd.f32 %v490, %v508
    %v511 = vadd.f32 %v491, %v508
    %v512 = vadd.f32 %v492, %v508
    %v513 = vadd.f32 %v493, %v508
    %v514 = vadd.f32 %v494, %v508
    %v515 = vadd.f32 %v495, %v508
    %v516 = vadd.f32 %v496, %v508
    %v517 = vadd.f32 %v497, %v508
    %v518 = vadd.f32 %v498, %v508
    %v519 = vadd.f32 %v499, %v508
    %v520 = vadd.f32 %v500, %v508
    %v521 = vadd.f32 %v501, %v508
    %v522 = vadd.f32 %v502, %v508
    %v523 = vadd.f32 %v503, %v508
    %v524 = vadd.f32 %v504, %v508
    %525 = vst.msk [vmem:[#allocation2] sm:$0xff] %vm275, %v509
    %526 = vst.msk [vmem:[#allocation2 + $0x8] sm:$0xff] %vm275, %v510
    %527 = vst.msk [vmem:[#allocation2 + $0x10] sm:$0xff] %vm275, %v511
    %528 = vst.msk [vmem:[#allocation2 + $0x18] sm:$0xff] %vm275, %v512
    %529 = vst.msk [vmem:[#allocation2 + $0x20] sm:$0xff] %vm275, %v513
    %530 = vst.msk [vmem:[#allocation2 + $0x28] sm:$0xff] %vm275, %v514
    %531 = vst.msk [vmem:[#allocation2 + $0x30] sm:$0xff] %vm275, %v515
    %532 = vst.msk [vmem:[#allocation2 + $0x38] sm:$0xff] %vm275, %v516
    %533 = vst.msk [vmem:[#allocation2 + $0x40] sm:$0xff] %vm275, %v517
    %534 = vst.msk [vmem:[#allocation2 + $0x48] sm:$0xff] %vm275, %v518
    %535 = vst.msk [vmem:[#allocation2 + $0x50] sm:$0xff] %vm275, %v519
    %536 = vst.msk [vmem:[#allocation2 + $0x58] sm:$0xff] %vm275, %v520
    %537 = vst.msk [vmem:[#allocation2 + $0x60] sm:$0xff] %vm275, %v521
    %538 = vst.msk [vmem:[#allocation2 + $0x68] sm:$0xff] %vm275, %v522
    %539 = vst.msk [vmem:[#allocation2 + $0x70] sm:$0xff] %vm275, %v523
    %540 = vst.msk [vmem:[#allocation2 + $0x78] sm:$0xff] %vm275, %v524
    // Predicated region
    $region14: #{tpu_custom_call.1} parent=1 // pred_check
      _
    $region15: #{tpu_custom_call.1} parent=1 // pred_check_branch
      %542 = sbr.rel (0) target = $region17
    $region16: #{tpu_custom_call.1} parent=1 // pred_region
      %s544 = ssub.s32 2048, 512
      %545 = vsyncadd [#allocation3], %s544
      %s546 = sshll.u32 [#allocation2], 4
      %s547 = int_to_ptr.vmem [resolvable:$true] %s546
      %552 = dma.vmem_to_hbm [thread:$0]  %s547, 512, %s3, [#allocation3], 128, 128, 8
    $region17: #{tpu_custom_call.1} parent=1 // pred_fallthru
      _
    // Predicated region
    $region18: #{tpu_custom_call.1} parent=1 // pred_check
      _
    $region19: #{tpu_custom_call.1} parent=1 // pred_check_branch
      %554 = sbr.rel (0) target = $region21
    $region20: #{tpu_custom_call.1} parent=1 // pred_region
      %555 = dma.done [#allocation3], 2048
    $region21: #{tpu_custom_call.1} parent=1 // pred_fallthru
      _
    %556 = vsyncpa [#allocation3], 1

</llo_original>
